<compile_context>
chip_gen: v5e
topology: v5e:2x2
jax: 0.10.0
libtpu: 0.0.40
codegen_flags: <defaults>
</compile_context>

<pallas_src>
import functools

import jax
import jax.numpy as jnp
from jax import lax
from jax.experimental import pallas as pl
from jax.experimental.pallas import tpu as pltpu

_LANE = 128
_MIN_TB = 16


def _round_up(x, m):
    return ((x + m - 1) // m) * m


def _vmem_capacity_bytes():
    try:
        return int(pltpu.get_tpu_info().vmem_capacity_bytes)
    except Exception:
        return 64 * 1024 * 1024               # conservative (v7x-sized) fallback


def _has_bf16_vector_units():
    # v2-v5 have no bf16 VPU/EUP -> a bf16 round-trip there is pure VALU overhead.
    try:
        kind = jax.devices()[0].device_kind.lower()
    except Exception:
        return True
    return not any(tag in kind for tag in ("v2", "v3", "v4", "v5"))


# --------------------------------------------------------------------------- #
# Kernels
# --------------------------------------------------------------------------- #
def _ce_kernel_single(logits_ref, tgt_ref, out_ref, *, ignore_index, compute_dtype):
    """Whole class row resident in VMEM; batch is grid-tiled."""
    x = logits_ref[...]
    if x.dtype != compute_dtype:
        x = x.astype(compute_dtype)                     # single cast (or none)
    tgt = tgt_ref[...]                                  # [TB, 1] int32
    TB, C = x.shape

    col = lax.broadcasted_iota(jnp.int32, (TB, C), 1)
    mask_t = col == tgt                                 # bool mask, no f32 one-hot

    m = jnp.max(x, axis=-1, keepdims=True)
    shifted = x - m
    e = jnp.exp(shifted)                                # bf16 EUP on v6e/v7x
    lse = jnp.log(jnp.sum(e.astype(jnp.float32), axis=-1, keepdims=True))
    t = jnp.sum(jnp.where(mask_t, shifted, jnp.array(0, x.dtype)),
                axis=-1, keepdims=True).astype(jnp.float32)

    ce = lse - t                                        # [TB, 1] f32
    ce = jnp.where(tgt == ignore_index, 0.0, ce)
    out_ref[...] = ce


def _ce_kernel_tiled(logits_ref, tgt_ref, out_ref, m_sc, l_sc, t_sc, *,
                     num_classes, class_tile, ignore_index, compute_dtype):
    """Class axis grid-tiled (innermost reduction axis); online log-sum-exp."""
    ci = pl.program_id(1)

    @pl.when(ci == 0)
    def _():
        m_sc[...] = jnp.full(m_sc.shape, -jnp.inf, m_sc.dtype)
        l_sc[...] = jnp.zeros(l_sc.shape, l_sc.dtype)
        t_sc[...] = jnp.zeros(t_sc.shape, t_sc.dtype)

    x = logits_ref[...]
    if x.dtype != compute_dtype:
        x = x.astype(compute_dtype)
    tgt = tgt_ref[...]                                  # [TB, 1] int32
    TB, TC = x.shape

    col = class_tile * ci + lax.broadcasted_iota(jnp.int32, (TB, TC), 1)
    mask_t = col == tgt

    if num_classes % class_tile != 0:
        # Only needed when C is not tile-aligned (static): garbage lanes of the
        # partial edge block become -inf and vanish through max/exp.
        x = jnp.where(col < num_classes, x, jnp.array(-jnp.inf, x.dtype))

    m_prev = m_sc[...]                                                  # f32
    local_max = jnp.max(x, axis=-1, keepdims=True).astype(jnp.float32)
    m_new = jnp.maximum(m_prev, local_max)

    shifted = x - m_new.astype(x.dtype)
    e = jnp.exp(shifted)
    psum = jnp.sum(e.astype(jnp.float32), axis=-1, keepdims=True)

    # alpha == 0 on the first tile (m_prev = -inf); guard the all(-inf)-row case.
    alpha = jnp.exp(m_prev - m_new)
    alpha = jnp.where(m_new == -jnp.inf, 0.0, alpha)

    l_sc[...] = alpha * l_sc[...] + psum
    m_sc[...] = m_new
    t_sc[...] += jnp.sum(jnp.where(mask_t, x, jnp.array(0, x.dtype)),
                         axis=-1, keepdims=True).astype(jnp.float32)

    @pl.when(ci == pl.num_programs(1) - 1)
    def _():
        ce = jnp.log(l_sc[...]) + m_sc[...] - t_sc[...]
        ce = jnp.where(tgt == ignore_index, 0.0, ce)
        out_ref[...] = ce


# --------------------------------------------------------------------------- #
# Wrapper (mirrors linnaeus CrossEntropyLoss.forward -> per-sample loss [B])
# --------------------------------------------------------------------------- #
def cross_entropy_loss(logits, target, weight=None, apply_class_weights=False,
                       ignore_index=None, *, batch_tile=256, class_tile=None,
                       max_single_block_bytes=None, bf16_math=None):
    B, C = logits.shape

    if target.ndim == 2:
        if target.shape[1] != C:
            raise ValueError(f"Target shape {target.shape} incompatible with "
                             f"input shape {logits.shape}")
        target_idx = jnp.argmax(target, axis=1)         # one-hot / soft -> indices
    elif target.ndim == 1:
        target_idx = target
    else:
        raise ValueError(f"Target tensor has invalid shape {target.shape}")
    target_idx = target_idx.astype(jnp.int32)
    tgt2d = target_idx.reshape(B, 1)

    eff_ign = -100 if ignore_index is None else int(ignore_index)
    itemsize = jnp.dtype(logits.dtype).itemsize

    # ---- generation-aware knobs ---------------------------------------------
    vmem_cap = _vmem_capacity_bytes()
    if max_single_block_bytes is None:
        max_single_block_bytes = vmem_cap // 8           # 8 MiB v7x, 16 MiB v5e/v6e
    if class_tile is None:
        class_tile = 4096 if itemsize <= 2 else 2048     # ~2 MiB streamed blocks
    if bf16_math is None:
        bf16_math = (logits.dtype == jnp.bfloat16) and _has_bf16_vector_units()
    compute_dtype = (jnp.bfloat16 if (bf16_math and logits.dtype == jnp.bfloat16)
                     else jnp.float32)

    # ---- batch tiling (no wrapper pad: partial edge blocks are fine) --------
    if B > batch_tile:
        TB = batch_tile
    elif B >= 2 * _MIN_TB:
        # >= 2 grid steps so both v7x TensorCores get work and DMA overlaps.
        TB = _round_up(pl.cdiv(B, 2), _MIN_TB)
    else:
        TB = B                                           # full dim, no (8,128) rule
    nb = pl.cdiv(B, TB)

    use_class_tiling = (TB * C * itemsize > max_single_block_bytes) and (C > class_tile)

    if not use_class_tiling:
        kernel = functools.partial(_ce_kernel_single, ignore_index=eff_ign,
                                   compute_dtype=compute_dtype)
        grid = (nb,)
        in_specs = [pl.BlockSpec((TB, C), lambda i: (i, 0)),
                    pl.BlockSpec((TB, 1), lambda i: (i, 0))]
        out_spec = pl.BlockSpec((TB, 1), lambda i: (i, 0))
        scratch = []
        dims = ("parallel",)
        vmem_est = 2 * TB * C * itemsize + 4 * TB * _LANE * 4
    else:
        TC = class_tile
        nc = pl.cdiv(C, TC)
        kernel = functools.partial(_ce_kernel_tiled, num_classes=C, class_tile=TC,
                                   ignore_index=eff_ign, compute_dtype=compute_dtype)
        grid = (nb, nc)
        in_specs = [pl.BlockSpec((TB, TC), lambda i, c: (i, c)),
                    pl.BlockSpec((TB, 1), lambda i, c: (i, 0))]
        out_spec = pl.BlockSpec((TB, 1), lambda i, c: (i, 0))
        scratch = [pltpu.VMEM((TB, 1), jnp.float32) for _ in range(3)]
        dims = ("parallel", "arbitrary")                 # reduction axis innermost
        vmem_est = 2 * TB * TC * itemsize + 7 * TB * _LANE * 4

    # Explicit VMEM budget; leave >= 16 MiB headroom (48 MiB cap on 64 MiB v7x).
    vmem_limit = int(min(max(vmem_cap - 16 * 1024 * 1024, 16 * 1024 * 1024),
                         max(32 * 1024 * 1024, 2 * vmem_est)))

    out = pl.pallas_call(
        kernel,
        out_shape=jax.ShapeDtypeStruct((B, 1), jnp.float32),
        grid=grid,
        in_specs=in_specs,
        out_specs=out_spec,
        scratch_shapes=scratch,
        compiler_params=pltpu.CompilerParams(
            dimension_semantics=dims,
            vmem_limit_bytes=vmem_limit),
    )(logits, tgt2d)

    ce = out[:, 0]
    if weight is not None and apply_class_weights:
        # Per-sample weight gather in the wrapper (tiny [B] gather + multiply);
        # ignored rows are already 0 in ce, so 0 * w keeps them 0.
        w = jnp.asarray(weight, jnp.float32)
        ce = ce * w[jnp.clip(target_idx, 0, C - 1)]
    return ce


# --------------------------------------------------------------------------- #
# Plain-JAX reference for validation
# --------------------------------------------------------------------------- #
def _reference(logits, target_idx, weight, apply_class_weights, ignore_index):
    logits = logits.astype(jnp.float32)
    m = jnp.max(logits, axis=-1, keepdims=True)
    lse = jnp.log(jnp.sum(jnp.exp(logits - m), axis=-1)) + m[:, 0]
    tgt_safe = jnp.clip(target_idx, 0, logits.shape[1] - 1)
    tgt_logit = jnp.take_along_axis(logits, tgt_safe[:, None], axis=1)[:, 0]
    ce = lse - tgt_logit
    if weight is not None and apply_class_weights:
        ce = ce * jnp.asarray(weight, jnp.float32)[tgt_safe]
    eff_ign = ignore_index if ignore_index is not None else -100
    return jnp.where(target_idx == eff_ign, 0.0, ce)


if __name__ == "__main__":
    key = jax.random.PRNGKey(0)
    k1, k2, k3, k4, k5, k6 = jax.random.split(key, 6)

    # ---- Case 1: plain per-sample CE, hard labels (single-block path) --------
    B, C = 8, 32
    logits = jax.random.normal(k1, (B, C), dtype=jnp.float32)
    target = jax.random.randint(k2, (B,), 0, C, dtype=jnp.int32)
    out1 = cross_entropy_loss(logits, target)
    jax.block_until_ready(out1)
    ref1 = _reference(logits, target, None, False, None)
    assert jnp.allclose(out1, ref1, atol=1e-5, rtol=1e-5)

    # ---- Case 2: one-hot targets + class weights + ignore_index --------------
    class_weight = 0.5 + jax.random.uniform(k3, (C,), dtype=jnp.float32)
    ignore_index = 3
    target_ign = target.at[0].set(ignore_index)
    onehot_tgt = jax.nn.one_hot(target_ign, C, dtype=jnp.float32)
    out2 = cross_entropy_loss(logits, onehot_tgt, weight=class_weight,
                              apply_class_weights=True, ignore_index=ignore_index)
    jax.block_until_ready(out2)
    ref2 = _reference(logits, target_ign, class_weight, True, ignore_index)
    assert jnp.allclose(out2, ref2, atol=1e-5, rtol=1e-5)

    # ---- Case 3: force class-tiled (online-LSE) path, unaligned B and C ------
    B3, C3 = 24, 160                    # B -> 2 partial batch blocks, C -> partial class tile
    logits3 = jax.random.normal(k4, (B3, C3), dtype=jnp.float32)
    target3 = jax.random.randint(k5, (B3,), 0, C3, dtype=jnp.int32)
    weight3 = 0.5 + jax.random.uniform(k6, (C3,), dtype=jnp.float32)
    ign3 = 7
    target3 = target3.at[0].set(ign3)
    out3 = cross_entropy_loss(logits3, target3, weight=weight3,
                              apply_class_weights=True, ignore_index=ign3,
                              batch_tile=16, class_tile=128,
                              max_single_block_bytes=0)
    jax.block_until_ready(out3)
    ref3 = _reference(logits3, target3, weight3, True, ign3)
    assert jnp.allclose(out3, ref3, atol=1e-5, rtol=1e-5)

    # ---- Case 4: bf16 logits (bf16 math on v6e/v7x, f32 on older chips) ------
    logits_bf16 = logits.astype(jnp.bfloat16)
    out4 = cross_entropy_loss(logits_bf16, target)
    jax.block_until_ready(out4)
    ref4 = _reference(logits_bf16.astype(jnp.float32), target, None, False, None)
    assert jnp.allclose(out4, ref4, atol=5e-2, rtol=5e-2)

    print("KERNEL_OK")
</pallas_src>

<mosaic_0001>
module attributes {stable_mosaic.version = 11 : i64} {
  func.func @_ce_kernel_single(%arg0: i32, %arg1: memref<8x32xf32, #tpu.memory_space<vmem>>, %arg2: memref<8x1xi32, #tpu.memory_space<vmem>>, %arg3: memref<8x1xf32, #tpu.memory_space<vmem>>) attributes {dimension_semantics = [#tpu.dimension_semantics<parallel>], iteration_bounds = array<i64: 1>, scalar_prefetch = 0 : i64, scratch_operands = 0 : i64, tpu.core_type = #tpu.core_type<tc>, window_params = [{transform_indices = @transform_0, window_bounds = array<i64: 8, 32>}, {transform_indices = @transform_1, window_bounds = array<i64: 8, 1>}, {transform_indices = @transform_2, window_bounds = array<i64: 8, 1>}]} {
    %c0 = arith.constant 0 : index
    %c0_0 = arith.constant 0 : index
    %0 = vector.load %arg1[%c0, %c0_0] : memref<8x32xf32, #tpu.memory_space<vmem>>, vector<8x32xf32>
    %c0_1 = arith.constant 0 : index
    %c0_2 = arith.constant 0 : index
    %1 = vector.load %arg2[%c0_1, %c0_2] : memref<8x1xi32, #tpu.memory_space<vmem>>, vector<8x1xi32>
    %2 = tpu.iota {dimensions = array<i32: 1>} : vector<8x32xi32>
    %3 = vector.broadcast %1 : vector<8x1xi32> to vector<8x32xi32>
    %4 = arith.cmpi eq, %2, %3 : vector<8x32xi32>
    %cst = arith.constant dense<0xFF800000> : vector<8xf32>
    %5 = vector.multi_reduction <maximumf>, %0, %cst [1] : vector<8x32xf32> to vector<8xf32>
    %6 = vector.shape_cast %5 : vector<8xf32> to vector<8x1xf32>
    %7 = vector.broadcast %6 : vector<8x1xf32> to vector<8x32xf32>
    %8 = arith.subf %0, %7 : vector<8x32xf32>
    %9 = math.exp %8 : vector<8x32xf32>
    %cst_3 = arith.constant dense<0.000000e+00> : vector<8xf32>
    %10 = vector.multi_reduction <add>, %9, %cst_3 [1] : vector<8x32xf32> to vector<8xf32>
    %11 = vector.shape_cast %10 : vector<8xf32> to vector<8x1xf32>
    %12 = math.log %11 : vector<8x1xf32>
    %cst_4 = arith.constant 0.000000e+00 : f32
    %13 = vector.broadcast %cst_4 : f32 to vector<8x32xf32>
    %14 = arith.select %4, %8, %13 : vector<8x32xi1>, vector<8x32xf32>
    %cst_5 = arith.constant dense<0.000000e+00> : vector<8xf32>
    %15 = vector.multi_reduction <add>, %14, %cst_5 [1] : vector<8x32xf32> to vector<8xf32>
    %16 = vector.shape_cast %15 : vector<8xf32> to vector<8x1xf32>
    %17 = arith.subf %12, %16 : vector<8x1xf32>
    %c-100_i32 = arith.constant -100 : i32
    %18 = vector.broadcast %c-100_i32 : i32 to vector<8x1xi32>
    %19 = arith.cmpi eq, %1, %18 : vector<8x1xi32>
    %cst_6 = arith.constant 0.000000e+00 : f32
    %20 = vector.broadcast %cst_6 : f32 to vector<8x1xf32>
    %21 = arith.select %19, %20, %17 : vector<8x1xi1>, vector<8x1xf32>
    %c0_7 = arith.constant 0 : index
    %c0_8 = arith.constant 0 : index
    %22 = vector.load %arg3[%c0_7, %c0_8] : memref<8x1xf32, #tpu.memory_space<vmem>>, vector<8x1xf32>
    tpu.vector_store %arg3[%c0_7, %c0_8], %21 {strides = array<i32>} : memref<8x1xf32, #tpu.memory_space<vmem>>, vector<8x1xf32>,
    return
  }
  func.func @transform_0(%arg0: i32) -> (i32, i32) {
    %c0_i32 = arith.constant 0 : i32
    %c0_i32_0 = arith.constant 0 : i32
    return %arg0, %c0_i32 : i32, i32
  }
  func.func @transform_1(%arg0: i32) -> (i32, i32) {
    %c0_i32 = arith.constant 0 : i32
    %c0_i32_0 = arith.constant 0 : i32
    return %arg0, %c0_i32 : i32, i32
  }
  func.func @transform_2(%arg0: i32) -> (i32, i32) {
    %c0_i32 = arith.constant 0 : i32
    %c0_i32_0 = arith.constant 0 : i32
    return %arg0, %c0_i32 : i32, i32
  }
}

</mosaic_0001>

<llo_original>
// kernel: tpu_custom_call.1
$region0: #{tpu_custom_call.1}
  #allocation0 [shape = 'u32[]', space=smem, size = 0x4, offset = 0x4, fixed_abs, tag = 'smem constant byte address 0x4 - core index']
  #allocation1 [shape = 'u32[72,128]{1,0:T(1,128)}', space=vmem, size = 0x9000, scoped, tag = 'internal scratch']
  %s0 = inlined_call_operand.vmem [shape: f32[8,32], index: 0, kind: input, shape index: {}]
  %s1 = inlined_call_operand.vmem [shape: s32[8,1], index: 1, kind: input, shape index: {}]
  %s2 = inlined_call_operand.vmem [shape: f32[8,1], index: 2, kind: output, shape index: {}]
  %s3 = sld [smem:[#allocation0]]
  $region18: #{tpu_custom_call.1} parent=0
    _
  %s5 = ssub.s32 1, %s3
  %s6 = scalar_select 0, %s5, %s3
  // Predicated region
  $region2: #{tpu_custom_call.1} parent=0 // pred_check
    _
  $region3: #{tpu_custom_call.1} parent=0 // pred_check_branch
    %8 = sbr.rel (0) target = $region5
  $region4: #{tpu_custom_call.1} parent=0 // pred_region
    _
  $region5: #{tpu_custom_call.1} parent=0 // pred_fallthru
    _
  // Predicated region
  $region6: #{tpu_custom_call.1} parent=0 // pred_check
    _
  $region7: #{tpu_custom_call.1} parent=0 // pred_check_branch
    %10 = sbr.rel (0) target = $region9
  $region8: #{tpu_custom_call.1} parent=0 // pred_region
    _
  $region9: #{tpu_custom_call.1} parent=0 // pred_fallthru
    _
  %v11 = vld [vmem:[%s0] sm:$0xff]
  %v12 = vld [vmem:[%s1] sm:$0xff]
  %v13 = vlaneseq
  %v14 = vand.u32 %v13, 127
  %15 = vset.pattern.permute.xlu0 0
  %16 = vperm.xlu0 %15, %v12
  %v17 = vpop.permute.xlu0 %16
  %vm18 = vcmp.eq.s32.totalorder %v14, %v17
  %vm19 = vcmask 261120
  %v20 = vsel %vm19, %v11, -inf
  %21 = vmax.xlane.f32.xlu0 %v20
  %v22 = vpop.xlane.xlu0 %21
  %v23 = vsub.f32 %v11, %v22
  %v24 = vmul.f32 %v23, 1.442695
  %v25 = vpow.pop %v24
  %v26 = vsel %vm19, %v25, 0.0
  %27 = vadd.xlane.f32.xlu0 %v26
  %v28 = vpop.xlane.xlu0 %27
  %v29 = vlog2.pop %v28
  %v30 = vmul.f32 %v29, 0.6931472
  %v31 = vsel %vm18, %v23, 0.0
  %v32 = vsel %vm19, %v31, 0.0
  %33 = vadd.xlane.f32.xlu0 %v32
  %v34 = vpop.xlane.xlu0 %33
  %v35 = vsub.f32 %v30, %v34
  %vm36 = vcmp.eq.s32.totalorder %v12, 4294967196
  %v37 = vsel %vm36, 0.0, %v35
  %vm38 = vcmask 7168
  %39 = vst.msk [vmem:[%s2] sm:$0xff] %vm38, %v37
  // Predicated region
  $region10: #{tpu_custom_call.1} parent=0 // pred_check
    _
  $region11: #{tpu_custom_call.1} parent=0 // pred_check_branch
    %41 = sbr.rel (0) target = $region13
  $region12: #{tpu_custom_call.1} parent=0 // pred_region
    _
  $region13: #{tpu_custom_call.1} parent=0 // pred_fallthru
    _
  // Predicated region
  $region14: #{tpu_custom_call.1} parent=0 // pred_check
    _
  $region15: #{tpu_custom_call.1} parent=0 // pred_check_branch
    %43 = sbr.rel (0) target = $region17
  $region16: #{tpu_custom_call.1} parent=0 // pred_region
    _
  $region17: #{tpu_custom_call.1} parent=0 // pred_fallthru
    _

</llo_original>
